<compile_context>
chip_gen: v5e
topology: v5e:2x2
jax: 0.10.0
libtpu: 0.0.40
codegen_flags: <defaults>
</compile_context>

<pallas_src>
import jax
import jax.numpy as jnp
from jax.experimental import pallas as pl
from jax.experimental.pallas import tpu as pltpu


def _round_up(x, m):
    return ((x + m - 1) // m) * m


def _path_attention_kernel(x_ref, w1_ref, w2_ref, o_ref):
    # x_ref : (TB, P, E_pad)  f32 slab of the input
    # w1_ref: (E_pad, H_pad)  linear1.weight.T (zero padded)
    # w2_ref: (1, H_pad)      linear2.weight   (zero padded row)
    # o_ref : (TB, E_pad)     lane-dense pooled output
    tb, p, e = x_ref.shape

    x3 = x_ref[...]                                           # (TB, P, E)
    x2 = x3.reshape(tb * p, e)                                # (TB*P, E) tile-aligned merge

    # linear1 + tanh: a single batch-folded MXU matmul per grid step, full-f32
    # precision so results track the PyTorch reference on every generation.
    h2 = jnp.tanh(
        jnp.dot(
            x2,
            w1_ref[...],
            preferred_element_type=jnp.float32,
            precision=jax.lax.Precision.HIGHEST,
        )
    )                                                         # (TB*P, H)
    h3 = h2.reshape(tb, p, -1)                                # (TB, P, H)

    # linear2 (H -> 1) as VPU multiply + XLU lane reduce (no N=1 MXU matmul).
    w2_row = w2_ref[...][None]                                # (1, 1, H)
    s = jnp.sum(h3 * w2_row, axis=-1, keepdims=True)          # (TB, P, 1)

    # softmax over the pool dimension (the block always covers the full P).
    m = jnp.max(s, axis=1, keepdims=True)                     # (TB, 1, 1)
    e_ = jnp.exp(s - m)                                       # (TB, P, 1)
    denom = jnp.sum(e_, axis=1, keepdims=True)                # (TB, 1, 1)
    w = e_ / denom                                            # exact divide (tiny; keeps accuracy)

    # attention pooling: weighted sum over P (VPU mul + sublane reduce).
    pooled = jnp.sum(w * x3, axis=1)                          # (TB, E)
    o_ref[...] = pooled.astype(o_ref.dtype)


def path_attention(x, w1, w2, *, rows_target=256, max_tile_bytes=4 * 1024 * 1024):
    """PathAttention forward pass.

    x : (B, P, E) input; w1 : (H, E) = linear1.weight; w2 : (1, H) = linear2.weight.
    Returns (B, E) attention-pooled embeddings (matches the PyTorch module).
    """
    B, P, E = x.shape
    H = w1.shape[0]

    # Lane-dense padding of the embedding / hidden dims (zeros contribute 0).
    E_pad = _round_up(E, 128)
    H_pad = _round_up(H, 128)

    # Batch tile: fold enough batch elements per grid step to feed the MXU
    # (>= rows_target rows of M) while keeping the double-buffered x slab small
    # enough for the default scoped-VMEM on every generation (incl. v7x 64 MiB).
    tb = max(1, pl.cdiv(rows_target, P))
    cap = max(1, max_tile_bytes // (P * E_pad * 4))
    tb = min(tb, cap)
    if tb >= B:
        tb = B                      # single grid step; block == full batch
    else:
        tb = _round_up(tb, 8)       # keep the (TB, E_pad) out block sublane-aligned
    B_pad = _round_up(B, tb)
    grid = (B_pad // tb,)

    x_p = jnp.pad(x.astype(jnp.float32), ((0, B_pad - B), (0, 0), (0, E_pad - E)))
    w1t = jnp.pad(jnp.asarray(w1, jnp.float32).T, ((0, E_pad - E), (0, H_pad - H)))
    w2r = jnp.pad(jnp.asarray(w2, jnp.float32), ((0, 0), (0, H_pad - H)))

    out = pl.pallas_call(
        _path_attention_kernel,
        out_shape=jax.ShapeDtypeStruct((B_pad, E_pad), jnp.float32),
        grid_spec=pltpu.PrefetchScalarGridSpec(
            num_scalar_prefetch=0,
            grid=grid,
            in_specs=[
                pl.BlockSpec((tb, P, E_pad), lambda b: (b, 0, 0)),
                pl.BlockSpec((E_pad, H_pad), lambda b: (0, 0)),
                pl.BlockSpec((1, H_pad), lambda b: (0, 0)),
            ],
            out_specs=pl.BlockSpec((tb, E_pad), lambda b: (b, 0)),
        ),
        compiler_params=pltpu.CompilerParams(
            # Batch-tile axis is parallel: v7x's two TensorCores can split it;
            # no-op on the single-TC v5e/v6e.
            dimension_semantics=("parallel",),
        ),
    )(x_p, w1t, w2r)
    return out[:B, :E]


def path_attention_ref(x, w1, w2):
    """Pure-JAX reference mirroring the PyTorch forward (f32-accurate matmuls)."""
    hp = jax.lax.Precision.HIGHEST
    h = jnp.tanh(jnp.einsum("bpe,he->bph", x, w1, precision=hp))   # (B, P, H)
    s = jnp.einsum("bph,h->bp", h, w2[0], precision=hp)            # (B, P)
    w = jax.nn.softmax(s, axis=1)                                  # (B, P)
    return jnp.einsum("bp,bpe->be", w, x, precision=hp)            # (B, E)


if __name__ == "__main__":
    # Small shapes consistent with the module: batch=2, pool=8,
    # embedding(input_size)=32, hidden_size=32.
    B, P, E, H = 2, 8, 32, 32

    key = jax.random.PRNGKey(0)
    kx, kw1, kw2 = jax.random.split(key, 3)

    x = jax.random.normal(kx, (B, P, E), dtype=jnp.float32)
    # Deterministic init matching __init_weight: uniform(-0.1, 0.1)
    w1 = jax.random.uniform(kw1, (H, E), minval=-0.1, maxval=0.1, dtype=jnp.float32)
    w2 = jax.random.uniform(kw2, (1, H), minval=-0.1, maxval=0.1, dtype=jnp.float32)

    out = path_attention(x, w1, w2)
    out = jax.block_until_ready(out)

    ref = path_attention_ref(x, w1, w2)
    assert out.shape == (B, E)
    assert jnp.allclose(out, ref, atol=2e-3, rtol=2e-3), "mismatch vs reference"

    print("KERNEL_OK")
</pallas_src>

<mosaic_0001>
module attributes {stable_mosaic.version = 11 : i64} {
  func.func @_path_attention_kernel(%arg0: i32, %arg1: memref<2x8x128xf32, #tpu.memory_space<vmem>>, %arg2: memref<128x128xf32, #tpu.memory_space<vmem>>, %arg3: memref<1x128xf32, #tpu.memory_space<vmem>>, %arg4: memref<2x128xf32, #tpu.memory_space<vmem>>) attributes {dimension_semantics = [#tpu.dimension_semantics<parallel>], iteration_bounds = array<i64: 1>, scalar_prefetch = 0 : i64, scratch_operands = 0 : i64, tpu.core_type = #tpu.core_type<tc>, window_params = [{transform_indices = @transform_0, window_bounds = array<i64: 2, 8, 128>}, {pipeline_mode = #tpu.pipeline_mode<synchronous>, transform_indices = @transform_1, window_bounds = array<i64: 128, 128>}, {pipeline_mode = #tpu.pipeline_mode<synchronous>, transform_indices = @transform_2, window_bounds = array<i64: 1, 128>}, {transform_indices = @transform_3, window_bounds = array<i64: 2, 128>}]} {
    %c0 = arith.constant 0 : index
    %c0_0 = arith.constant 0 : index
    %c0_1 = arith.constant 0 : index
    %0 = vector.load %arg1[%c0, %c0_0, %c0_1] : memref<2x8x128xf32, #tpu.memory_space<vmem>>, vector<2x8x128xf32>
    %1 = vector.shape_cast %0 : vector<2x8x128xf32> to vector<16x128xf32>
    %c0_2 = arith.constant 0 : index
    %c0_3 = arith.constant 0 : index
    %2 = vector.load %arg2[%c0_2, %c0_3] : memref<128x128xf32, #tpu.memory_space<vmem>>, vector<128x128xf32>
    %cst = arith.constant dense<0.000000e+00> : vector<16x128xf32>
    %3 = tpu.matmul %1, %2, %cst {dimension_numbers = #tpu.dot_dimension_numbers<[1], [0], [0], [1], [0, 0, 1, 1], [], []>, precision = #tpu.contract_precision<fp32>} : vector<16x128xf32>, vector<128x128xf32>, vector<16x128xf32> -> vector<16x128xf32>
    %4 = math.tanh %3 : vector<16x128xf32>
    %5 = vector.shape_cast %4 : vector<16x128xf32> to vector<2x8x128xf32>
    %c0_4 = arith.constant 0 : index
    %c0_5 = arith.constant 0 : index
    %6 = vector.load %arg3[%c0_4, %c0_5] : memref<1x128xf32, #tpu.memory_space<vmem>>, vector<1x128xf32>
    %7 = vector.shape_cast %6 : vector<1x128xf32> to vector<1x1x128xf32>
    %8 = vector.broadcast %7 : vector<1x1x128xf32> to vector<2x8x128xf32>
    %9 = arith.mulf %5, %8 : vector<2x8x128xf32>
    %cst_6 = arith.constant dense<0.000000e+00> : vector<2x8xf32>
    %10 = vector.multi_reduction <add>, %9, %cst_6 [2] : vector<2x8x128xf32> to vector<2x8xf32>
    %11 = vector.shape_cast %10 : vector<2x8xf32> to vector<2x8x1xf32>
    %cst_7 = arith.constant dense<0xFF800000> : vector<2x1xf32>
    %12 = vector.multi_reduction <maximumf>, %11, %cst_7 [1] : vector<2x8x1xf32> to vector<2x1xf32>
    %13 = vector.shape_cast %12 : vector<2x1xf32> to vector<2x1x1xf32>
    %14 = vector.broadcast %13 : vector<2x1x1xf32> to vector<2x8x1xf32>
    %15 = arith.subf %11, %14 : vector<2x8x1xf32>
    %16 = math.exp %15 : vector<2x8x1xf32>
    %cst_8 = arith.constant dense<0.000000e+00> : vector<2x1xf32>
    %17 = vector.multi_reduction <add>, %16, %cst_8 [1] : vector<2x8x1xf32> to vector<2x1xf32>
    %18 = vector.shape_cast %17 : vector<2x1xf32> to vector<2x1x1xf32>
    %19 = vector.broadcast %18 : vector<2x1x1xf32> to vector<2x8x1xf32>
    %20 = arith.divf %16, %19 : vector<2x8x1xf32>
    %21 = vector.broadcast %20 : vector<2x8x1xf32> to vector<2x8x128xf32>
    %22 = arith.mulf %21, %0 : vector<2x8x128xf32>
    %cst_9 = arith.constant dense<0.000000e+00> : vector<2x128xf32>
    %23 = vector.multi_reduction <add>, %22, %cst_9 [1] : vector<2x8x128xf32> to vector<2x128xf32>
    %c0_10 = arith.constant 0 : index
    %c0_11 = arith.constant 0 : index
    %24 = vector.load %arg4[%c0_10, %c0_11] : memref<2x128xf32, #tpu.memory_space<vmem>>, vector<2x128xf32>
    tpu.vector_store %arg4[%c0_10, %c0_11], %23 {strides = array<i32>} : memref<2x128xf32, #tpu.memory_space<vmem>>, vector<2x128xf32>,
    return
  }
  func.func @transform_0(%arg0: i32) -> (i32, i32, i32) {
    %c0_i32 = arith.constant 0 : i32
    %c0_i32_0 = arith.constant 0 : i32
    %c0_i32_1 = arith.constant 0 : i32
    return %arg0, %c0_i32, %c0_i32_0 : i32, i32, i32
  }
  func.func @transform_1(%arg0: i32) -> (i32, i32) {
    %c0_i32 = arith.constant 0 : i32
    %c0_i32_0 = arith.constant 0 : i32
    %c0_i32_1 = arith.constant 0 : i32
    return %c0_i32, %c0_i32_0 : i32, i32
  }
  func.func @transform_2(%arg0: i32) -> (i32, i32) {
    %c0_i32 = arith.constant 0 : i32
    %c0_i32_0 = arith.constant 0 : i32
    %c0_i32_1 = arith.constant 0 : i32
    return %c0_i32, %c0_i32_0 : i32, i32
  }
  func.func @transform_3(%arg0: i32) -> (i32, i32) {
    %c0_i32 = arith.constant 0 : i32
    %c0_i32_0 = arith.constant 0 : i32
    return %arg0, %c0_i32 : i32, i32
  }
}

</mosaic_0001>

<llo_original>
// kernel: tpu_custom_call.1
$region0: #{tpu_custom_call.1}
  #allocation0 [shape = 'u32[]', space=smem, size = 0x4, offset = 0x4, fixed_abs, tag = 'smem constant byte address 0x4 - core index']
  #allocation1 [shape = 'u32[72,128]{1,0:T(1,128)}', space=vmem, size = 0x9000, scoped, tag = 'internal scratch']
  %s0 = inlined_call_operand.hbm [shape: f32[2,8,128], index: 0, kind: input, shape index: {}]
  %s1 = inlined_call_operand.hbm [shape: f32[128,128], index: 1, kind: input, shape index: {}]
  %s2 = inlined_call_operand.vmem [shape: f32[1,128], index: 2, kind: input, shape index: {}]
  %s3 = inlined_call_operand.hbm [shape: f32[2,128], index: 3, kind: output, shape index: {}]
  %s4 = sld [smem:[#allocation0]]
  $region30: #{tpu_custom_call.1} parent=0
    _
  %s6 = ssub.s32 1, %s4
  %s7 = scalar_select 0, %s6, %s4
  $region1: #{tpu_custom_call.1} parent=0
    #allocation2 [shape = 'u8[8192]{0}', space=vmem, size = 0x2000, scoped, tag = 'input window, operand 0, single buffered']
    #allocation3 [shape = 's32[1]{0}', space=sflag, size = 0x4, scoped, tag = 'scoped memory for tpu_custom_call.1']
    #allocation4 [shape = 's32[1]{0}', space=sflag, size = 0x4, scoped, tag = 'scoped memory for tpu_custom_call.1']
    #allocation5 [shape = 'u8[65536]{0}', space=vmem, size = 0x10000, scoped, tag = 'input window, operand 1, single buffered']
    #allocation6 [shape = 's32[1]{0}', space=sflag, size = 0x4, scoped, tag = 'scoped memory for tpu_custom_call.1']
    #allocation7 [shape = 'u8[1024]{0}', space=vmem, size = 0x400, scoped, tag = 'output window, operand 0, single buffered']
    %8 = vsyncpa [#allocation3], 0
    %9 = vsyncpa [#allocation6], 0
    %10 = vsyncpa [#allocation4], 0
    // Predicated region
    $region2: #{tpu_custom_call.1} parent=1 // pred_check
      _
    $region3: #{tpu_custom_call.1} parent=1 // pred_check_branch
      %12 = sbr.rel (0) target = $region5
    $region4: #{tpu_custom_call.1} parent=1 // pred_region
      %14 = vsyncadd [#allocation3], 0
      %s15 = sshll.u32 %s0, 4
      %s16 = int_to_ptr.hbm [resolvable:$true] %s15
      %s17 = sshll.u32 [#allocation2], 4
      %s18 = int_to_ptr.vmem [resolvable:$true] %s17
      %23 = dma.hbm_to_vmem [thread:$0]  %s16, 256, %s18, [#allocation3], 128, 128, 8
    $region5: #{tpu_custom_call.1} parent=1 // pred_fallthru
      _
    // Predicated region
    $region6: #{tpu_custom_call.1} parent=1 // pred_check
      _
    $region7: #{tpu_custom_call.1} parent=1 // pred_check_branch
      %25 = sbr.rel (0) target = $region9
    $region8: #{tpu_custom_call.1} parent=1 // pred_region
      %27 = vsyncadd [#allocation6], 0
      %s28 = sshll.u32 %s1, 4
      %s29 = int_to_ptr.hbm [resolvable:$true] %s28
      %s30 = sshll.u32 [#allocation5], 4
      %s31 = int_to_ptr.vmem [resolvable:$true] %s30
      %36 = dma.hbm_to_vmem [thread:$0]  %s29, 2048, %s31, [#allocation6], 128, 128, 8
    $region9: #{tpu_custom_call.1} parent=1 // pred_fallthru
      _
    // Predicated region
    $region10: #{tpu_custom_call.1} parent=1 // pred_check
      _
    $region11: #{tpu_custom_call.1} parent=1 // pred_check_branch
      %38 = sbr.rel (0) target = $region13
    $region12: #{tpu_custom_call.1} parent=1 // pred_region
      _
    $region13: #{tpu_custom_call.1} parent=1 // pred_fallthru
      _
    // Predicated region
    $region14: #{tpu_custom_call.1} parent=1 // pred_check
      _
    $region15: #{tpu_custom_call.1} parent=1 // pred_check_branch
      %40 = sbr.rel (0) target = $region17
    $region16: #{tpu_custom_call.1} parent=1 // pred_region
      %42 = dma.done [#allocation3], 256
    $region17: #{tpu_custom_call.1} parent=1 // pred_fallthru
      _
    // Predicated region
    $region18: #{tpu_custom_call.1} parent=1 // pred_check
      _
    $region19: #{tpu_custom_call.1} parent=1 // pred_check_branch
      %44 = sbr.rel (0) target = $region21
    $region20: #{tpu_custom_call.1} parent=1 // pred_region
      %46 = dma.done [#allocation6], 2048
    $region21: #{tpu_custom_call.1} parent=1 // pred_fallthru
      _
    %v47 = vld [vmem:[#allocation2] sm:$0xff]
    %v48 = vld [vmem:[#allocation2 + $0x8] sm:$0xff]
    %v49 = vld [vmem:[#allocation5] sm:$0xff]
    %v50 = vld [vmem:[#allocation5 + $0x8] sm:$0xff]
    %v51 = vld [vmem:[#allocation5 + $0x10] sm:$0xff]
    %v52 = vld [vmem:[#allocation5 + $0x18] sm:$0xff]
    %v53 = vld [vmem:[#allocation5 + $0x20] sm:$0xff]
    %v54 = vld [vmem:[#allocation5 + $0x28] sm:$0xff]
    %v55 = vld [vmem:[#allocation5 + $0x30] sm:$0xff]
    %v56 = vld [vmem:[#allocation5 + $0x38] sm:$0xff]
    %v57 = vld [vmem:[#allocation5 + $0x40] sm:$0xff]
    %v58 = vld [vmem:[#allocation5 + $0x48] sm:$0xff]
    %v59 = vld [vmem:[#allocation5 + $0x50] sm:$0xff]
    %v60 = vld [vmem:[#allocation5 + $0x58] sm:$0xff]
    %v61 = vld [vmem:[#allocation5 + $0x60] sm:$0xff]
    %v62 = vld [vmem:[#allocation5 + $0x68] sm:$0xff]
    %v63 = vld [vmem:[#allocation5 + $0x70] sm:$0xff]
    %v64 = vld [vmem:[#allocation5 + $0x78] sm:$0xff]
    %v65 = vand.u32 %v64, 4294901760
    %66 = vmatpush.msra.mxu0 %v65
    %v67 = vand.u32 %v63, 4294901760
    %68 = vmatpush.msra.mxu0 %v67
    %v69 = vand.u32 %v62, 4294901760
    %70 = vmatpush.msra.mxu0 %v69
    %v71 = vand.u32 %v61, 4294901760
    %72 = vmatpush.msra.mxu0 %v71
    %v73 = vand.u32 %v60, 4294901760
    %74 = vmatpush.msra.mxu0 %v73
    %v75 = vand.u32 %v59, 4294901760
    %76 = vmatpush.msra.mxu0 %v75
    %v77 = vand.u32 %v58, 4294901760
    %78 = vmatpush.msra.mxu0 %v77
    %v79 = vand.u32 %v57, 4294901760
    %80 = vmatpush.msra.mxu0 %v79
    %v81 = vand.u32 %v56, 4294901760
    %82 = vmatpush.msra.mxu0 %v81
    %v83 = vand.u32 %v55, 4294901760
    %84 = vmatpush.msra.mxu0 %v83
    %v85 = vand.u32 %v54, 4294901760
    %86 = vmatpush.msra.mxu0 %v85
    %v87 = vand.u32 %v53, 4294901760
    %88 = vmatpush.msra.mxu0 %v87
    %v89 = vand.u32 %v52, 4294901760
    %90 = vmatpush.msra.mxu0 %v89
    %v91 = vand.u32 %v51, 4294901760
    %92 = vmatpush.msra.mxu0 %v91
    %v93 = vand.u32 %v50, 4294901760
    %94 = vmatpush.msra.mxu0 %v93
    %v95 = vand.u32 %v49, 4294901760
    %96 = vmatpush.msra.mxu0 %v95
    %v97 = vand.u32 %v47, 4294901760
    %v98 = vsub.f32 %v47, %v97
    %v99 = vand.u32 %v98, 4294901760
    %v100 = vsub.f32 %v98, %v99
    %v101 = vand.u32 %v100, 4294901760
    %102 = vmatmul.f32.gmra.mxu0 %v101
    %v103 = vpop.f32.mrf.mxu0
    %v104 = vadd.f32 0.0, %v103
    %v105 = vand.u32 %v48, 4294901760
    %v106 = vsub.f32 %v48, %v105
    %v107 = vand.u32 %v106, 4294901760
    %v108 = vsub.f32 %v106, %v107
    %v109 = vand.u32 %v108, 4294901760
    %110 = vmatmul.f32.gmra.mxu0 %v109
    %v111 = vpop.f32.mrf.mxu0
    %v112 = vadd.f32 0.0, %v111
    %113 = vdwg.mxu0
    %v114 = vand.u32 %v64, 4294901760
    %v115 = vsub.f32 %v64, %v114
    %v116 = vand.u32 %v115, 4294901760
    %v117 = vsub.f32 %v115, %v116
    %v118 = vand.u32 %v117, 4294901760
    %119 = vmatpush.msra.mxu0 %v118
    %v120 = vand.u32 %v63, 4294901760
    %v121 = vsub.f32 %v63, %v120
    %v122 = vand.u32 %v121, 4294901760
    %v123 = vsub.f32 %v121, %v122
    %v124 = vand.u32 %v123, 4294901760
    %125 = vmatpush.msra.mxu0 %v124
    %v126 = vand.u32 %v62, 4294901760
    %v127 = vsub.f32 %v62, %v126
    %v128 = vand.u32 %v127, 4294901760
    %v129 = vsub.f32 %v127, %v128
    %v130 = vand.u32 %v129, 4294901760
    %131 = vmatpush.msra.mxu0 %v130
    %v132 = vand.u32 %v61, 4294901760
    %v133 = vsub.f32 %v61, %v132
    %v134 = vand.u32 %v133, 4294901760
    %v135 = vsub.f32 %v133, %v134
    %v136 = vand.u32 %v135, 4294901760
    %137 = vmatpush.msra.mxu0 %v136
    %v138 = vand.u32 %v60, 4294901760
    %v139 = vsub.f32 %v60, %v138
    %v140 = vand.u32 %v139, 4294901760
    %v141 = vsub.f32 %v139, %v140
    %v142 = vand.u32 %v141, 4294901760
    %143 = vmatpush.msra.mxu0 %v142
    %v144 = vand.u32 %v59, 4294901760
    %v145 = vsub.f32 %v59, %v144
    %v146 = vand.u32 %v145, 4294901760
    %v147 = vsub.f32 %v145, %v146
    %v148 = vand.u32 %v147, 4294901760
    %149 = vmatpush.msra.mxu0 %v148
    %v150 = vand.u32 %v58, 4294901760
    %v151 = vsub.f32 %v58, %v150
    %v152 = vand.u32 %v151, 4294901760
    %v153 = vsub.f32 %v151, %v152
    %v154 = vand.u32 %v153, 4294901760
    %155 = vmatpush.msra.mxu0 %v154
    %v156 = vand.u32 %v57, 4294901760
    %v157 = vsub.f32 %v57, %v156
    %v158 = vand.u32 %v157, 4294901760
    %v159 = vsub.f32 %v157, %v158
    %v160 = vand.u32 %v159, 4294901760
    %161 = vmatpush.msra.mxu0 %v160
    %v162 = vand.u32 %v56, 4294901760
    %v163 = vsub.f32 %v56, %v162
    %v164 = vand.u32 %v163, 4294901760
    %v165 = vsub.f32 %v163, %v164
    %v166 = vand.u32 %v165, 4294901760
    %167 = vmatpush.msra.mxu0 %v166
    %v168 = vand.u32 %v55, 4294901760
    %v169 = vsub.f32 %v55, %v168
    %v170 = vand.u32 %v169, 4294901760
    %v171 = vsub.f32 %v169, %v170
    %v172 = vand.u32 %v171, 4294901760
    %173 = vmatpush.msra.mxu0 %v172
    %v174 = vand.u32 %v54, 4294901760
    %v175 = vsub.f32 %v54, %v174
    %v176 = vand.u32 %v175, 4294901760
    %v177 = vsub.f32 %v175, %v176
    %v178 = vand.u32 %v177, 4294901760
    %179 = vmatpush.msra.mxu0 %v178
    %v180 = vand.u32 %v53, 4294901760
    %v181 = vsub.f32 %v53, %v180
    %v182 = vand.u32 %v181, 4294901760
    %v183 = vsub.f32 %v181, %v182
    %v184 = vand.u32 %v183, 4294901760
    %185 = vmatpush.msra.mxu0 %v184
    %v186 = vand.u32 %v52, 4294901760
    %v187 = vsub.f32 %v52, %v186
    %v188 = vand.u32 %v187, 4294901760
    %v189 = vsub.f32 %v187, %v188
    %v190 = vand.u32 %v189, 4294901760
    %191 = vmatpush.msra.mxu0 %v190
    %v192 = vand.u32 %v51, 4294901760
    %v193 = vsub.f32 %v51, %v192
    %v194 = vand.u32 %v193, 4294901760
    %v195 = vsub.f32 %v193, %v194
    %v196 = vand.u32 %v195, 4294901760
    %197 = vmatpush.msra.mxu0 %v196
    %v198 = vand.u32 %v50, 4294901760
    %v199 = vsub.f32 %v50, %v198
    %v200 = vand.u32 %v199, 4294901760
    %v201 = vsub.f32 %v199, %v200
    %v202 = vand.u32 %v201, 4294901760
    %203 = vmatpush.msra.mxu0 %v202
    %v204 = vand.u32 %v49, 4294901760
    %v205 = vsub.f32 %v49, %v204
    %v206 = vand.u32 %v205, 4294901760
    %v207 = vsub.f32 %v205, %v206
    %v208 = vand.u32 %v207, 4294901760
    %209 = vmatpush.msra.mxu0 %v208
    %v210 = vand.u32 %v47, 4294901760
    %211 = vmatmul.f32.gmra.mxu0 %v210
    %v212 = vpop.f32.mrf.mxu0
    %v213 = vadd.f32 %v104, %v212
    %v214 = vand.u32 %v48, 4294901760
    %215 = vmatmul.f32.gmra.mxu0 %v214
    %v216 = vpop.f32.mrf.mxu0
    %v217 = vadd.f32 %v112, %v216
    %218 = vdwg.mxu0
    %v219 = vand.u32 %v64, 4294901760
    %v220 = vsub.f32 %v64, %v219
    %221 = vmatpush.msra.mxu0 %v220
    %v222 = vand.u32 %v63, 4294901760
    %v223 = vsub.f32 %v63, %v222
    %224 = vmatpush.msra.mxu0 %v223
    %v225 = vand.u32 %v62, 4294901760
    %v226 = vsub.f32 %v62, %v225
    %227 = vmatpush.msra.mxu0 %v226
    %v228 = vand.u32 %v61, 4294901760
    %v229 = vsub.f32 %v61, %v228
    %230 = vmatpush.msra.mxu0 %v229
    %v231 = vand.u32 %v60, 4294901760
    %v232 = vsub.f32 %v60, %v231
    %233 = vmatpush.msra.mxu0 %v232
    %v234 = vand.u32 %v59, 4294901760
    %v235 = vsub.f32 %v59, %v234
    %236 = vmatpush.msra.mxu0 %v235
    %v237 = vand.u32 %v58, 4294901760
    %v238 = vsub.f32 %v58, %v237
    %239 = vmatpush.msra.mxu0 %v238
    %v240 = vand.u32 %v57, 4294901760
    %v241 = vsub.f32 %v57, %v240
    %242 = vmatpush.msra.mxu0 %v241
    %v243 = vand.u32 %v56, 4294901760
    %v244 = vsub.f32 %v56, %v243
    %245 = vmatpush.msra.mxu0 %v244
    %v246 = vand.u32 %v55, 4294901760
    %v247 = vsub.f32 %v55, %v246
    %248 = vmatpush.msra.mxu0 %v247
    %v249 = vand.u32 %v54, 4294901760
    %v250 = vsub.f32 %v54, %v249
    %251 = vmatpush.msra.mxu0 %v250
    %v252 = vand.u32 %v53, 4294901760
    %v253 = vsub.f32 %v53, %v252
    %254 = vmatpush.msra.mxu0 %v253
    %v255 = vand.u32 %v52, 4294901760
    %v256 = vsub.f32 %v52, %v255
    %257 = vmatpush.msra.mxu0 %v256
    %v258 = vand.u32 %v51, 4294901760
    %v259 = vsub.f32 %v51, %v258
    %260 = vmatpush.msra.mxu0 %v259
    %v261 = vand.u32 %v50, 4294901760
    %v262 = vsub.f32 %v50, %v261
    %263 = vmatpush.msra.mxu0 %v262
    %v264 = vand.u32 %v49, 4294901760
    %v265 = vsub.f32 %v49, %v264
    %266 = vmatpush.msra.mxu0 %v265
    %v267 = vand.u32 %v47, 4294901760
    %v268 = vsub.f32 %v47, %v267
    %269 = vmatmul.f32.gmra.mxu0 %v268
    %v270 = vpop.f32.mrf.mxu0
    %v271 = vadd.f32 %v213, %v270
    %v272 = vand.u32 %v48, 4294901760
    %v273 = vsub.f32 %v48, %v272
    %274 = vmatmul.f32.gmra.mxu0 %v273
    %v275 = vpop.f32.mrf.mxu0
    %v276 = vadd.f32 %v217, %v275
    %277 = vdwg.mxu0
    %v278 = vand.u32 %v64, 4294901760
    %279 = vmatpush.msra.mxu0 %v278
    %v280 = vand.u32 %v63, 4294901760
    %281 = vmatpush.msra.mxu0 %v280
    %v282 = vand.u32 %v62, 4294901760
    %283 = vmatpush.msra.mxu0 %v282
    %v284 = vand.u32 %v61, 4294901760
    %285 = vmatpush.msra.mxu0 %v284
    %v286 = vand.u32 %v60, 4294901760
    %287 = vmatpush.msra.mxu0 %v286
    %v288 = vand.u32 %v59, 4294901760
    %289 = vmatpush.msra.mxu0 %v288
    %v290 = vand.u32 %v58, 4294901760
    %291 = vmatpush.msra.mxu0 %v290
    %v292 = vand.u32 %v57, 4294901760
    %293 = vmatpush.msra.mxu0 %v292
    %v294 = vand.u32 %v56, 4294901760
    %295 = vmatpush.msra.mxu0 %v294
    %v296 = vand.u32 %v55, 4294901760
    %297 = vmatpush.msra.mxu0 %v296
    %v298 = vand.u32 %v54, 4294901760
    %299 = vmatpush.msra.mxu0 %v298
    %v300 = vand.u32 %v53, 4294901760
    %301 = vmatpush.msra.mxu0 %v300
    %v302 = vand.u32 %v52, 4294901760
    %303 = vmatpush.msra.mxu0 %v302
    %v304 = vand.u32 %v51, 4294901760
    %305 = vmatpush.msra.mxu0 %v304
    %v306 = vand.u32 %v50, 4294901760
    %307 = vmatpush.msra.mxu0 %v306
    %v308 = vand.u32 %v49, 4294901760
    %309 = vmatpush.msra.mxu0 %v308
    %v310 = vand.u32 %v47, 4294901760
    %v311 = vsub.f32 %v47, %v310
    %v312 = vand.u32 %v311, 4294901760
    %313 = vmatmul.f32.gmra.mxu0 %v312
    %v314 = vpop.f32.mrf.mxu0
    %v315 = vadd.f32 %v271, %v314
    %v316 = vand.u32 %v48, 4294901760
    %v317 = vsub.f32 %v48, %v316
    %v318 = vand.u32 %v317, 4294901760
    %319 = vmatmul.f32.gmra.mxu0 %v318
    %v320 = vpop.f32.mrf.mxu0
    %v321 = vadd.f32 %v276, %v320
    %322 = vdwg.mxu0
    %v323 = vand.u32 %v64, 4294901760
    %v324 = vsub.f32 %v64, %v323
    %v325 = vand.u32 %v324, 4294901760
    %326 = vmatpush.msra.mxu0 %v325
    %v327 = vand.u32 %v63, 4294901760
    %v328 = vsub.f32 %v63, %v327
    %v329 = vand.u32 %v328, 4294901760
    %330 = vmatpush.msra.mxu0 %v329
    %v331 = vand.u32 %v62, 4294901760
    %v332 = vsub.f32 %v62, %v331
    %v333 = vand.u32 %v332, 4294901760
    %334 = vmatpush.msra.mxu0 %v333
    %v335 = vand.u32 %v61, 4294901760
    %v336 = vsub.f32 %v61, %v335
    %v337 = vand.u32 %v336, 4294901760
    %338 = vmatpush.msra.mxu0 %v337
    %v339 = vand.u32 %v60, 4294901760
    %v340 = vsub.f32 %v60, %v339
    %v341 = vand.u32 %v340, 4294901760
    %342 = vmatpush.msra.mxu0 %v341
    %v343 = vand.u32 %v59, 4294901760
    %v344 = vsub.f32 %v59, %v343
    %v345 = vand.u32 %v344, 4294901760
    %346 = vmatpush.msra.mxu0 %v345
    %v347 = vand.u32 %v58, 4294901760
    %v348 = vsub.f32 %v58, %v347
    %v349 = vand.u32 %v348, 4294901760
    %350 = vmatpush.msra.mxu0 %v349
    %v351 = vand.u32 %v57, 4294901760
    %v352 = vsub.f32 %v57, %v351
    %v353 = vand.u32 %v352, 4294901760
    %354 = vmatpush.msra.mxu0 %v353
    %v355 = vand.u32 %v56, 4294901760
    %v356 = vsub.f32 %v56, %v355
    %v357 = vand.u32 %v356, 4294901760
    %358 = vmatpush.msra.mxu0 %v357
    %v359 = vand.u32 %v55, 4294901760
    %v360 = vsub.f32 %v55, %v359
    %v361 = vand.u32 %v360, 4294901760
    %362 = vmatpush.msra.mxu0 %v361
    %v363 = vand.u32 %v54, 4294901760
    %v364 = vsub.f32 %v54, %v363
    %v365 = vand.u32 %v364, 4294901760
    %366 = vmatpush.msra.mxu0 %v365
    %v367 = vand.u32 %v53, 4294901760
    %v368 = vsub.f32 %v53, %v367
    %v369 = vand.u32 %v368, 4294901760
    %370 = vmatpush.msra.mxu0 %v369
    %v371 = vand.u32 %v52, 4294901760
    %v372 = vsub.f32 %v52, %v371
    %v373 = vand.u32 %v372, 4294901760
    %374 = vmatpush.msra.mxu0 %v373
    %v375 = vand.u32 %v51, 4294901760
    %v376 = vsub.f32 %v51, %v375
    %v377 = vand.u32 %v376, 4294901760
    %378 = vmatpush.msra.mxu0 %v377
    %v379 = vand.u32 %v50, 4294901760
    %v380 = vsub.f32 %v50, %v379
    %v381 = vand.u32 %v380, 4294901760
    %382 = vmatpush.msra.mxu0 %v381
    %v383 = vand.u32 %v49, 4294901760
    %v384 = vsub.f32 %v49, %v383
    %v385 = vand.u32 %v384, 4294901760
    %386 = vmatpush.msra.mxu0 %v385
    %v387 = vand.u32 %v47, 4294901760
    %388 = vmatmul.f32.gmra.mxu0 %v387
    %v389 = vpop.f32.mrf.mxu0
    %v390 = vadd.f32 %v315, %v389
    %v391 = vand.u32 %v48, 4294901760
    %392 = vmatmul.f32.gmra.mxu0 %v391
    %v393 = vpop.f32.mrf.mxu0
    %v394 = vadd.f32 %v321, %v393
    %395 = vdwg.mxu0
    %v396 = vand.u32 %v64, 4294901760
    %397 = vmatpush.msra.mxu0 %v396
    %v398 = vand.u32 %v63, 4294901760
    %399 = vmatpush.msra.mxu0 %v398
    %v400 = vand.u32 %v62, 4294901760
    %401 = vmatpush.msra.mxu0 %v400
    %v402 = vand.u32 %v61, 4294901760
    %403 = vmatpush.msra.mxu0 %v402
    %v404 = vand.u32 %v60, 4294901760
    %405 = vmatpush.msra.mxu0 %v404
    %v406 = vand.u32 %v59, 4294901760
    %407 = vmatpush.msra.mxu0 %v406
    %v408 = vand.u32 %v58, 4294901760
    %409 = vmatpush.msra.mxu0 %v408
    %v410 = vand.u32 %v57, 4294901760
    %411 = vmatpush.msra.mxu0 %v410
    %v412 = vand.u32 %v56, 4294901760
    %413 = vmatpush.msra.mxu0 %v412
    %v414 = vand.u32 %v55, 4294901760
    %415 = vmatpush.msra.mxu0 %v414
    %v416 = vand.u32 %v54, 4294901760
    %417 = vmatpush.msra.mxu0 %v416
    %v418 = vand.u32 %v53, 4294901760
    %419 = vmatpush.msra.mxu0 %v418
    %v420 = vand.u32 %v52, 4294901760
    %421 = vmatpush.msra.mxu0 %v420
    %v422 = vand.u32 %v51, 4294901760
    %423 = vmatpush.msra.mxu0 %v422
    %v424 = vand.u32 %v50, 4294901760
    %425 = vmatpush.msra.mxu0 %v424
    %v426 = vand.u32 %v49, 4294901760
    %427 = vmatpush.msra.mxu0 %v426
    %v428 = vand.u32 %v47, 4294901760
    %429 = vmatmul.f32.gmra.mxu0 %v428
    %v430 = vpop.f32.mrf.mxu0
    %v431 = vadd.f32 %v390, %v430
    %v432 = vand.u32 %v48, 4294901760
    %433 = vmatmul.f32.gmra.mxu0 %v432
    %v434 = vpop.f32.mrf.mxu0
    %v435 = vadd.f32 %v394, %v434
    %436 = vdwg.mxu0
    %v437 = vtanh.pop %v431
    %v438 = vtanh.pop %v435
    %v439 = vld [vmem:[%s2] sm:$0x1]
    %v441 = vperm.slane %v439, 0
    %v443 = vmul.f32 %v437, %v441
    %v444 = vmul.f32 %v438, %v441
    %445 = vadd.xlane.f32.xlu0 %v443
    %v446 = vpop.xlane.xlu0 %445
    %447 = vadd.xlane.f32.xlu0 %v444
    %v448 = vpop.xlane.xlu0 %447
    %v449 = vrot.slane %v446, 4
    %v450 = vmax.f32 %v446, %v449
    %v451 = vrot.slane %v450, 2
    %v452 = vmax.f32 %v450, %v451
    %v453 = vrot.slane %v452, 1
    %v454 = vmax.f32 %v452, %v453
    %v455 = vrot.slane %v448, 4
    %v456 = vmax.f32 %v448, %v455
    %v457 = vrot.slane %v456, 2
    %v458 = vmax.f32 %v456, %v457
    %v459 = vrot.slane %v458, 1
    %v460 = vmax.f32 %v458, %v459
    %v461 = vsub.f32 %v446, %v454
    %v462 = vsub.f32 %v448, %v460
    %v463 = vmul.f32 %v461, 1.442695
    %v464 = vpow.pop %v463
    %v465 = vmul.f32 %v462, 1.442695
    %v466 = vpow.pop %v465
    %v467 = vrot.slane %v464, 4
    %v468 = vadd.f32 %v464, %v467
    %v469 = vrot.slane %v468, 2
    %v470 = vadd.f32 %v468, %v469
    %v471 = vrot.slane %v470, 1
    %v472 = vadd.f32 %v470, %v471
    %v473 = vrot.slane %v466, 4
    %v474 = vadd.f32 %v466, %v473
    %v475 = vrot.slane %v474, 2
    %v476 = vadd.f32 %v474, %v475
    %v477 = vrot.slane %v476, 1
    %v478 = vadd.f32 %v476, %v477
    %v479 = vrcp.pop %v472
    %v480 = vmul.f32 %v472, %v479
    %v481 = vsub.f32 1.0, %v480
    %v482 = vmul.f32 %v479, %v481
    %v483 = vadd.f32 %v479, %v482
    %vm484 = vweird.f32 %v472
    %vm485 = vweird.f32 %v479
    %vm486 = vmor %vm484, %vm485
    %v487 = vsel %vm486, %v479, %v483
    %v488 = vand.u32 2147483647, %v472
    %vm489 = vcmp.eq.f32.partialorder %v488, 8.507059e+37
    %v490 = vand.u32 %v472, 2147483648
    %v491 = vor.u32 1.1754944e-38, %v490
    %v492 = vsel %vm489, %v491, %v487
    %v493 = vmul.f32 %v464, %v492
    %v494 = vrcp.pop %v478
    %v495 = vmul.f32 %v478, %v494
    %v496 = vsub.f32 1.0, %v495
    %v497 = vmul.f32 %v494, %v496
    %v498 = vadd.f32 %v494, %v497
    %vm499 = vweird.f32 %v478
    %vm500 = vweird.f32 %v494
    %vm501 = vmor %vm499, %vm500
    %v502 = vsel %vm501, %v494, %v498
    %v503 = vand.u32 2147483647, %v478
    %vm504 = vcmp.eq.f32.partialorder %v503, 8.507059e+37
    %v505 = vand.u32 %v478, 2147483648
    %v506 = vor.u32 1.1754944e-38, %v505
    %v507 = vsel %vm504, %v506, %v502
    %v508 = vmul.f32 %v466, %v507
    %v509 = vmul.f32 %v493, %v47
    %v510 = vmul.f32 %v508, %v48
    %v511 = vrot.slane %v509, 4
    %v512 = vadd.f32 %v509, %v511
    %v513 = vrot.slane %v512, 2
    %v514 = vadd.f32 %v512, %v513
    %v515 = vrot.slane %v514, 1
    %v516 = vadd.f32 %v514, %v515
    %v517 = vrot.slane %v510, 4
    %v518 = vadd.f32 %v510, %v517
    %v519 = vrot.slane %v518, 2
    %v520 = vadd.f32 %v518, %v519
    %v521 = vrot.slane %v520, 1
    %v522 = vadd.f32 %v520, %v521
    %vm525 = vcmask 1041409
    %v526 = vsel %vm525, %v522, %v516
    %528 = vst [vmem:[#allocation7] sm:$0x3] %v526
    // Predicated region
    $region22: #{tpu_custom_call.1} parent=1 // pred_check
      _
    $region23: #{tpu_custom_call.1} parent=1 // pred_check_branch
      %530 = sbr.rel (0) target = $region25
    $region24: #{tpu_custom_call.1} parent=1 // pred_region
      %532 = vsyncadd [#allocation4], 0
      %s534 = sshll.u32 [#allocation7], 4
      %s535 = int_to_ptr.vmem [resolvable:$true] %s534
      %s536 = sshll.u32 %s3, 4
      %s537 = int_to_ptr.hbm [resolvable:$true] %s536
      %539 = dma.vmem_to_hbm [thread:$0]  %s535, 32, %s537, [#allocation4]
    $region25: #{tpu_custom_call.1} parent=1 // pred_fallthru
      _
    // Predicated region
    $region26: #{tpu_custom_call.1} parent=1 // pred_check
      _
    $region27: #{tpu_custom_call.1} parent=1 // pred_check_branch
      %541 = sbr.rel (0) target = $region29
    $region28: #{tpu_custom_call.1} parent=1 // pred_region
      %543 = dma.done [#allocation4], 32
    $region29: #{tpu_custom_call.1} parent=1 // pred_fallthru
      _
    %544 = vsyncpa [#allocation3], 1
    %545 = vsyncpa [#allocation6], 1
    %546 = vsyncpa [#allocation4], 1

</llo_original>
